<compile_context>
chip_gen: v5e
topology: v5e:2x2
jax: 0.10.0
libtpu: 0.0.40
codegen_flags: <defaults>
</compile_context>

<pallas_src>
import functools

import jax
import jax.numpy as jnp
from jax.experimental import pallas as pl
from jax.experimental.pallas import tpu as pltpu

LANE = 128      # vreg lane width; feature dims padded to a multiple of this
TILE_B = 128    # batch tile (rows per grid step)


def _round_up(n, m):
    return (n + m - 1) // m * m


def simplenet_kernel(x_ref, w1_ref, b1_ref, w2_ref, b2_ref, o_ref):
    # fc1 on the MXU: bf16 operands, f32 accumulation.
    h = jnp.dot(x_ref[...], w1_ref[...], preferred_element_type=jnp.float32)
    h = jnp.maximum(h + b1_ref[...], 0.0)            # bias + ReLU in f32 (VPU)
    # fc2: cast the activation back to bf16 for the MXU, accumulate in f32.
    y = jnp.dot(h.astype(jnp.bfloat16), w2_ref[...],
                preferred_element_type=jnp.float32)
    o_ref[...] = (y + b2_ref[...]).astype(o_ref.dtype)


@functools.partial(jax.jit, static_argnames=("out_features",))
def simplenet_forward(x, w1p, b1p, w2p, b2p, *, out_features):
    """x: (B, In) f32.  w*/b* are pre-padded to LANE multiples
    (bf16 weights, f32 biases).  Returns (B, out_features) f32."""
    B, In = x.shape
    In_p, H_p = w1p.shape
    _, Out_p = w2p.shape

    # Pad batch to a TILE_B multiple and features to the padded width; the
    # padded weight/bias entries are zero so the valid outputs are unchanged.
    B_p = _round_up(max(B, TILE_B), TILE_B)
    xp = jnp.zeros((B_p, In_p), jnp.bfloat16).at[:B, :In].set(
        x.astype(jnp.bfloat16))

    grid = (B_p // TILE_B,)
    out = pl.pallas_call(
        simplenet_kernel,
        out_shape=jax.ShapeDtypeStruct((B_p, Out_p), jnp.float32),
        grid=grid,
        in_specs=[
            # batch-tiled input (double-buffered across grid steps)
            pl.BlockSpec((TILE_B, In_p), lambda i: (i, 0)),
            # weights / biases: grid-invariant, resident in VMEM
            pl.BlockSpec((In_p, H_p), lambda i: (0, 0)),
            pl.BlockSpec((1, H_p), lambda i: (0, 0)),
            pl.BlockSpec((H_p, Out_p), lambda i: (0, 0)),
            pl.BlockSpec((1, Out_p), lambda i: (0, 0)),
        ],
        out_specs=pl.BlockSpec((TILE_B, Out_p), lambda i: (i, 0)),
        compiler_params=pltpu.CompilerParams(
            # independent batch tiles: shard across TensorCores on v7x
            dimension_semantics=("parallel",),
        ),
    )(xp, w1p, b1p, w2p, b2p)
    return out[:B, :out_features]


def init_padded_params(key, input_size, hidden_size, output_size):
    """nn.Linear-style uniform(-1/sqrt(fan_in), +) init, returned both in the
    original (f32, unpadded) form and the padded bf16/f32 kernel form."""
    k1, k2, k3, k4 = jax.random.split(key, 4)
    bound1 = 1.0 / jnp.sqrt(input_size)
    bound2 = 1.0 / jnp.sqrt(hidden_size)
    w1 = jax.random.uniform(k1, (input_size, hidden_size), jnp.float32,
                            -bound1, bound1)
    b1 = jax.random.uniform(k2, (hidden_size,), jnp.float32, -bound1, bound1)
    w2 = jax.random.uniform(k3, (hidden_size, output_size), jnp.float32,
                            -bound2, bound2)
    b2 = jax.random.uniform(k4, (output_size,), jnp.float32, -bound2, bound2)

    In_p = _round_up(input_size, LANE)
    H_p = _round_up(hidden_size, LANE)
    Out_p = _round_up(output_size, LANE)

    w1p = jnp.zeros((In_p, H_p), jnp.bfloat16).at[
        :input_size, :hidden_size].set(w1.astype(jnp.bfloat16))
    b1p = jnp.zeros((1, H_p), jnp.float32).at[0, :hidden_size].set(b1)
    w2p = jnp.zeros((H_p, Out_p), jnp.bfloat16).at[
        :hidden_size, :output_size].set(w2.astype(jnp.bfloat16))
    b2p = jnp.zeros((1, Out_p), jnp.float32).at[0, :output_size].set(b2)
    return (w1, b1, w2, b2), (w1p, b1p, w2p, b2p)


if __name__ == "__main__":
    # Bag-of-words chatbot MLP sizes (data.pth not read; values built in-script):
    #   input_size=32 (vocab), hidden_size=64, output_size=16 (tags).
    # batch=64 keeps shapes small; it pads to one 128-row tile.
    # TODO(synk): data.pth loading / Dataset / DataLoader are host-side and not
    # part of the kernel; only SimpleNet.forward is implemented.
    batch, input_size, hidden_size, output_size = 64, 32, 64, 16

    key = jax.random.PRNGKey(0)
    kx, kp = jax.random.split(key)
    x = jax.random.normal(kx, (batch, input_size), jnp.float32)
    (w1, b1, w2, b2), (w1p, b1p, w2p, b2p) = init_padded_params(
        kp, input_size, hidden_size, output_size)

    out = simplenet_forward(x, w1p, b1p, w2p, b2p, out_features=output_size)
    out = jax.block_until_ready(out)
    assert out.shape == (batch, output_size)

    # Reference 1: same bf16-operand / f32-accumulate math as the kernel.
    xb = x.astype(jnp.bfloat16)
    h_ref = jnp.maximum(
        jnp.dot(xb, w1.astype(jnp.bfloat16),
                preferred_element_type=jnp.float32) + b1, 0.0)
    ref_bf16 = jnp.dot(h_ref.astype(jnp.bfloat16), w2.astype(jnp.bfloat16),
                       preferred_element_type=jnp.float32) + b2
    assert jnp.allclose(out, ref_bf16, atol=1e-2, rtol=1e-2), \
        float(jnp.max(jnp.abs(out - ref_bf16)))

    # Reference 2: pure-f32 PyTorch semantics (loose tol covers bf16 rounding).
    ref_f32 = jnp.maximum(x @ w1 + b1, 0.0) @ w2 + b2
    assert jnp.allclose(out, ref_f32, atol=1e-1, rtol=1e-1)

    print("KERNEL_OK")
</pallas_src>

<mosaic_0001>
module attributes {stable_mosaic.version = 11 : i64} {
  func.func @simplenet_kernel(%arg0: i32, %arg1: memref<128x128xbf16, #tpu.memory_space<vmem>>, %arg2: memref<128x128xbf16, #tpu.memory_space<vmem>>, %arg3: memref<1x128xf32, #tpu.memory_space<vmem>>, %arg4: memref<128x128xbf16, #tpu.memory_space<vmem>>, %arg5: memref<1x128xf32, #tpu.memory_space<vmem>>, %arg6: memref<128x128xf32, #tpu.memory_space<vmem>>) attributes {dimension_semantics = [#tpu.dimension_semantics<parallel>], iteration_bounds = array<i64: 1>, scalar_prefetch = 0 : i64, scratch_operands = 0 : i64, tpu.core_type = #tpu.core_type<tc>, window_params = [{transform_indices = @transform_0, window_bounds = array<i64: 128, 128>}, {pipeline_mode = #tpu.pipeline_mode<synchronous>, transform_indices = @transform_1, window_bounds = array<i64: 128, 128>}, {pipeline_mode = #tpu.pipeline_mode<synchronous>, transform_indices = @transform_2, window_bounds = array<i64: 1, 128>}, {pipeline_mode = #tpu.pipeline_mode<synchronous>, transform_indices = @transform_3, window_bounds = array<i64: 128, 128>}, {pipeline_mode = #tpu.pipeline_mode<synchronous>, transform_indices = @transform_4, window_bounds = array<i64: 1, 128>}, {transform_indices = @transform_5, window_bounds = array<i64: 128, 128>}]} {
    %c0 = arith.constant 0 : index
    %c0_0 = arith.constant 0 : index
    %0 = vector.load %arg1[%c0, %c0_0] : memref<128x128xbf16, #tpu.memory_space<vmem>>, vector<128x128xbf16>
    %c0_1 = arith.constant 0 : index
    %c0_2 = arith.constant 0 : index
    %1 = vector.load %arg2[%c0_1, %c0_2] : memref<128x128xbf16, #tpu.memory_space<vmem>>, vector<128x128xbf16>
    %cst = arith.constant dense<0.000000e+00> : vector<128x128xf32>
    %2 = tpu.matmul %0, %1, %cst {dimension_numbers = #tpu.dot_dimension_numbers<[1], [0], [0], [1], [0, 0, 1, 1], [], []>} : vector<128x128xbf16>, vector<128x128xbf16>, vector<128x128xf32> -> vector<128x128xf32>
    %c0_3 = arith.constant 0 : index
    %c0_4 = arith.constant 0 : index
    %3 = vector.load %arg3[%c0_3, %c0_4] : memref<1x128xf32, #tpu.memory_space<vmem>>, vector<1x128xf32>
    %4 = vector.broadcast %3 : vector<1x128xf32> to vector<128x128xf32>
    %5 = arith.addf %2, %4 : vector<128x128xf32>
    %cst_5 = arith.constant 0.000000e+00 : f32
    %6 = vector.broadcast %cst_5 : f32 to vector<128x128xf32>
    %7 = arith.maximumf %5, %6 : vector<128x128xf32>
    %8 = arith.truncf %7 : vector<128x128xf32> to vector<128x128xbf16>
    %c0_6 = arith.constant 0 : index
    %c0_7 = arith.constant 0 : index
    %9 = vector.load %arg4[%c0_6, %c0_7] : memref<128x128xbf16, #tpu.memory_space<vmem>>, vector<128x128xbf16>
    %cst_8 = arith.constant dense<0.000000e+00> : vector<128x128xf32>
    %10 = tpu.matmul %8, %9, %cst_8 {dimension_numbers = #tpu.dot_dimension_numbers<[1], [0], [0], [1], [0, 0, 1, 1], [], []>} : vector<128x128xbf16>, vector<128x128xbf16>, vector<128x128xf32> -> vector<128x128xf32>
    %c0_9 = arith.constant 0 : index
    %c0_10 = arith.constant 0 : index
    %11 = vector.load %arg5[%c0_9, %c0_10] : memref<1x128xf32, #tpu.memory_space<vmem>>, vector<1x128xf32>
    %12 = vector.broadcast %11 : vector<1x128xf32> to vector<128x128xf32>
    %13 = arith.addf %10, %12 : vector<128x128xf32>
    %c0_11 = arith.constant 0 : index
    %c0_12 = arith.constant 0 : index
    %14 = vector.load %arg6[%c0_11, %c0_12] : memref<128x128xf32, #tpu.memory_space<vmem>>, vector<128x128xf32>
    tpu.vector_store %arg6[%c0_11, %c0_12], %13 {strides = array<i32>} : memref<128x128xf32, #tpu.memory_space<vmem>>, vector<128x128xf32>,
    return
  }
  func.func @transform_0(%arg0: i32) -> (i32, i32) {
    %c0_i32 = arith.constant 0 : i32
    %c0_i32_0 = arith.constant 0 : i32
    return %arg0, %c0_i32 : i32, i32
  }
  func.func @transform_1(%arg0: i32) -> (i32, i32) {
    %c0_i32 = arith.constant 0 : i32
    %c0_i32_0 = arith.constant 0 : i32
    %c0_i32_1 = arith.constant 0 : i32
    return %c0_i32, %c0_i32_0 : i32, i32
  }
  func.func @transform_2(%arg0: i32) -> (i32, i32) {
    %c0_i32 = arith.constant 0 : i32
    %c0_i32_0 = arith.constant 0 : i32
    %c0_i32_1 = arith.constant 0 : i32
    return %c0_i32, %c0_i32_0 : i32, i32
  }
  func.func @transform_3(%arg0: i32) -> (i32, i32) {
    %c0_i32 = arith.constant 0 : i32
    %c0_i32_0 = arith.constant 0 : i32
    %c0_i32_1 = arith.constant 0 : i32
    return %c0_i32, %c0_i32_0 : i32, i32
  }
  func.func @transform_4(%arg0: i32) -> (i32, i32) {
    %c0_i32 = arith.constant 0 : i32
    %c0_i32_0 = arith.constant 0 : i32
    %c0_i32_1 = arith.constant 0 : i32
    return %c0_i32, %c0_i32_0 : i32, i32
  }
  func.func @transform_5(%arg0: i32) -> (i32, i32) {
    %c0_i32 = arith.constant 0 : i32
    %c0_i32_0 = arith.constant 0 : i32
    return %arg0, %c0_i32 : i32, i32
  }
}

</mosaic_0001>

<llo_original>
// kernel: simplenet_forward.1
$region0: #{simplenet_forward.1}
  #allocation0 [shape = 'u32[]', space=smem, size = 0x4, offset = 0x4, fixed_abs, tag = 'smem constant byte address 0x4 - core index']
  #allocation1 [shape = 'u32[72,128]{1,0:T(1,128)}', space=vmem, size = 0x9000, scoped, tag = 'internal scratch']
  %s0 = inlined_call_operand.vmem [shape: bf16[128,128], index: 0, kind: input, shape index: {}]
  %s1 = inlined_call_operand.vmem [shape: bf16[128,128], index: 1, kind: input, shape index: {}]
  %s2 = inlined_call_operand.vmem [shape: f32[1,128], index: 2, kind: input, shape index: {}]
  %s3 = inlined_call_operand.vmem [shape: bf16[128,128], index: 3, kind: input, shape index: {}]
  %s4 = inlined_call_operand.vmem [shape: f32[1,128], index: 4, kind: input, shape index: {}]
  %s5 = inlined_call_operand.vmem [shape: f32[128,128], index: 5, kind: output, shape index: {}]
  %s6 = sld [smem:[#allocation0]]
  $region30: #{simplenet_forward.1} parent=0
    _
  %s8 = ssub.s32 1, %s6
  %s9 = scalar_select 0, %s8, %s6
  // Predicated region
  $region2: #{simplenet_forward.1} parent=0 // pred_check
    _
  $region3: #{simplenet_forward.1} parent=0 // pred_check_branch
    %11 = sbr.rel (0) target = $region5
  $region4: #{simplenet_forward.1} parent=0 // pred_region
    _
  $region5: #{simplenet_forward.1} parent=0 // pred_fallthru
    _
  // Predicated region
  $region6: #{simplenet_forward.1} parent=0 // pred_check
    _
  $region7: #{simplenet_forward.1} parent=0 // pred_check_branch
    %13 = sbr.rel (0) target = $region9
  $region8: #{simplenet_forward.1} parent=0 // pred_region
    _
  $region9: #{simplenet_forward.1} parent=0 // pred_fallthru
    _
  // Predicated region
  $region10: #{simplenet_forward.1} parent=0 // pred_check
    _
  $region11: #{simplenet_forward.1} parent=0 // pred_check_branch
    %15 = sbr.rel (0) target = $region13
  $region12: #{simplenet_forward.1} parent=0 // pred_region
    _
  $region13: #{simplenet_forward.1} parent=0 // pred_fallthru
    _
  // Predicated region
  $region14: #{simplenet_forward.1} parent=0 // pred_check
    _
  $region15: #{simplenet_forward.1} parent=0 // pred_check_branch
    %17 = sbr.rel (0) target = $region17
  $region16: #{simplenet_forward.1} parent=0 // pred_region
    _
  $region17: #{simplenet_forward.1} parent=0 // pred_fallthru
    _
  // Predicated region
  $region18: #{simplenet_forward.1} parent=0 // pred_check
    _
  $region19: #{simplenet_forward.1} parent=0 // pred_check_branch
    %19 = sbr.rel (0) target = $region21
  $region20: #{simplenet_forward.1} parent=0 // pred_region
    _
  $region21: #{simplenet_forward.1} parent=0 // pred_fallthru
    _
  %v20 = vld [vmem:[%s0] sm:$0xf]
  %v21 = vld [vmem:[%s0 + $0x4] sm:$0xf]
  %v22 = vld [vmem:[%s0 + $0x8] sm:$0xf]
  %v23 = vld [vmem:[%s0 + $0xc] sm:$0xf]
  %v24 = vld [vmem:[%s0 + $0x10] sm:$0xf]
  %v25 = vld [vmem:[%s0 + $0x14] sm:$0xf]
  %v26 = vld [vmem:[%s0 + $0x18] sm:$0xf]
  %v27 = vld [vmem:[%s0 + $0x1c] sm:$0xf]
  %v28 = vld [vmem:[%s0 + $0x20] sm:$0xf]
  %v29 = vld [vmem:[%s0 + $0x24] sm:$0xf]
  %v30 = vld [vmem:[%s0 + $0x28] sm:$0xf]
  %v31 = vld [vmem:[%s0 + $0x2c] sm:$0xf]
  %v32 = vld [vmem:[%s0 + $0x30] sm:$0xf]
  %v33 = vld [vmem:[%s0 + $0x34] sm:$0xf]
  %v34 = vld [vmem:[%s0 + $0x38] sm:$0xf]
  %v35 = vld [vmem:[%s0 + $0x3c] sm:$0xf]
  %v36 = vld [vmem:[%s1] sm:$0xf]
  %v37 = vld [vmem:[%s1 + $0x4] sm:$0xf]
  %v38 = vld [vmem:[%s1 + $0x8] sm:$0xf]
  %v39 = vld [vmem:[%s1 + $0xc] sm:$0xf]
  %v40 = vld [vmem:[%s1 + $0x10] sm:$0xf]
  %v41 = vld [vmem:[%s1 + $0x14] sm:$0xf]
  %v42 = vld [vmem:[%s1 + $0x18] sm:$0xf]
  %v43 = vld [vmem:[%s1 + $0x1c] sm:$0xf]
  %v44 = vld [vmem:[%s1 + $0x20] sm:$0xf]
  %v45 = vld [vmem:[%s1 + $0x24] sm:$0xf]
  %v46 = vld [vmem:[%s1 + $0x28] sm:$0xf]
  %v47 = vld [vmem:[%s1 + $0x2c] sm:$0xf]
  %v48 = vld [vmem:[%s1 + $0x30] sm:$0xf]
  %v49 = vld [vmem:[%s1 + $0x34] sm:$0xf]
  %v50 = vld [vmem:[%s1 + $0x38] sm:$0xf]
  %v51 = vld [vmem:[%s1 + $0x3c] sm:$0xf]
  %v52 = vld [vmem:[%s2] sm:$0x1]
  %v54 = vperm.slane %v52, 0
  %v72 = vunpack.c.l.b16 %v20
  %v73 = vunpack.c.l.b16 %v21
  %v74 = vunpack.c.l.b16 %v22
  %v75 = vunpack.c.l.b16 %v23
  %v76 = vunpack.c.l.b16 %v24
  %v77 = vunpack.c.l.b16 %v25
  %v78 = vunpack.c.l.b16 %v26
  %v79 = vunpack.c.l.b16 %v27
  %v80 = vunpack.c.l.b16 %v28
  %v81 = vunpack.c.l.b16 %v29
  %v82 = vunpack.c.l.b16 %v30
  %v83 = vunpack.c.l.b16 %v31
  %v84 = vunpack.c.l.b16 %v32
  %v85 = vunpack.c.l.b16 %v33
  %v86 = vunpack.c.l.b16 %v34
  %v87 = vunpack.c.l.b16 %v35
  %v88 = vpack.c.b16 %v73, %v72
  %v89 = vpack.c.b16 %v75, %v74
  %v90 = vpack.c.b16 %v77, %v76
  %v91 = vpack.c.b16 %v79, %v78
  %v92 = vpack.c.b16 %v81, %v80
  %v93 = vpack.c.b16 %v83, %v82
  %v94 = vpack.c.b16 %v85, %v84
  %v95 = vpack.c.b16 %v87, %v86
  %v120 = vunpack.c.l.b16 %v36
  %v121 = vunpack.c.l.b16 %v37
  %v122 = vunpack.c.l.b16 %v38
  %v123 = vunpack.c.l.b16 %v39
  %v124 = vunpack.c.l.b16 %v40
  %v125 = vunpack.c.l.b16 %v41
  %v126 = vunpack.c.l.b16 %v42
  %v127 = vunpack.c.l.b16 %v43
  %v128 = vunpack.c.l.b16 %v44
  %v129 = vunpack.c.l.b16 %v45
  %v130 = vunpack.c.l.b16 %v46
  %v131 = vunpack.c.l.b16 %v47
  %v132 = vunpack.c.l.b16 %v48
  %v133 = vunpack.c.l.b16 %v49
  %v134 = vunpack.c.l.b16 %v50
  %v135 = vunpack.c.l.b16 %v51
  %v136 = vpack.c.b16 %v121, %v120
  %v137 = vpack.c.b16 %v123, %v122
  %v138 = vpack.c.b16 %v125, %v124
  %v139 = vpack.c.b16 %v127, %v126
  %v140 = vpack.c.b16 %v129, %v128
  %v141 = vpack.c.b16 %v131, %v130
  %v142 = vpack.c.b16 %v133, %v132
  %v143 = vpack.c.b16 %v135, %v134
  %152 = vmatpush.bf16.msra.mxu0 %v143
  %153 = vmatpush.bf16.msra.mxu0 %v142
  %154 = vmatpush.bf16.msra.mxu0 %v141
  %155 = vmatpush.bf16.msra.mxu0 %v140
  %156 = vmatpush.bf16.msra.mxu0 %v139
  %157 = vmatpush.bf16.msra.mxu0 %v138
  %158 = vmatpush.bf16.msra.mxu0 %v137
  %159 = vmatpush.bf16.msra.mxu0 %v136
  %160 = vmatmul.bf16.gmra.mxu0 %v88
  %v161 = vpop.f32.mrf.mxu0
  %v162 = vadd.f32 %v54, %v161
  %v163 = vpop.f32.mrf.mxu0
  %v164 = vadd.f32 %v54, %v163
  %165 = vmatmul.bf16.gmra.mxu0 %v89
  %v166 = vpop.f32.mrf.mxu0
  %v167 = vadd.f32 %v54, %v166
  %v168 = vpop.f32.mrf.mxu0
  %v169 = vadd.f32 %v54, %v168
  %170 = vmatmul.bf16.gmra.mxu0 %v90
  %v171 = vpop.f32.mrf.mxu0
  %v172 = vadd.f32 %v54, %v171
  %v173 = vpop.f32.mrf.mxu0
  %v174 = vadd.f32 %v54, %v173
  %175 = vmatmul.bf16.gmra.mxu0 %v91
  %v176 = vpop.f32.mrf.mxu0
  %v177 = vadd.f32 %v54, %v176
  %v178 = vpop.f32.mrf.mxu0
  %v179 = vadd.f32 %v54, %v178
  %180 = vmatmul.bf16.gmra.mxu0 %v92
  %v181 = vpop.f32.mrf.mxu0
  %v182 = vadd.f32 %v54, %v181
  %v183 = vpop.f32.mrf.mxu0
  %v184 = vadd.f32 %v54, %v183
  %185 = vmatmul.bf16.gmra.mxu0 %v93
  %v186 = vpop.f32.mrf.mxu0
  %v187 = vadd.f32 %v54, %v186
  %v188 = vpop.f32.mrf.mxu0
  %v189 = vadd.f32 %v54, %v188
  %190 = vmatmul.bf16.gmra.mxu0 %v94
  %v191 = vpop.f32.mrf.mxu0
  %v192 = vadd.f32 %v54, %v191
  %v193 = vpop.f32.mrf.mxu0
  %v194 = vadd.f32 %v54, %v193
  %195 = vmatmul.bf16.gmra.mxu0 %v95
  %v196 = vpop.f32.mrf.mxu0
  %v197 = vadd.f32 %v54, %v196
  %v198 = vpop.f32.mrf.mxu0
  %v199 = vadd.f32 %v54, %v198
  %200 = vdwg.mxu0
  %v201 = vmax.f32 %v162, 0.0
  %v202 = vmax.f32 %v164, 0.0
  %v203 = vmax.f32 %v167, 0.0
  %v204 = vmax.f32 %v169, 0.0
  %v205 = vmax.f32 %v172, 0.0
  %v206 = vmax.f32 %v174, 0.0
  %v207 = vmax.f32 %v177, 0.0
  %v208 = vmax.f32 %v179, 0.0
  %v209 = vmax.f32 %v182, 0.0
  %v210 = vmax.f32 %v184, 0.0
  %v211 = vmax.f32 %v187, 0.0
  %v212 = vmax.f32 %v189, 0.0
  %v213 = vmax.f32 %v192, 0.0
  %v214 = vmax.f32 %v194, 0.0
  %v215 = vmax.f32 %v197, 0.0
  %v216 = vmax.f32 %v199, 0.0
  %v217 = vpack.c.bf16 %v202, %v201
  %v218 = vpack.c.bf16 %v204, %v203
  %v219 = vpack.c.bf16 %v206, %v205
  %v220 = vpack.c.bf16 %v208, %v207
  %v221 = vpack.c.bf16 %v210, %v209
  %v222 = vpack.c.bf16 %v212, %v211
  %v223 = vpack.c.bf16 %v214, %v213
  %v224 = vpack.c.bf16 %v216, %v215
  %v225 = vld [vmem:[%s3] sm:$0xf]
  %v226 = vld [vmem:[%s3 + $0x4] sm:$0xf]
  %v227 = vld [vmem:[%s3 + $0x8] sm:$0xf]
  %v228 = vld [vmem:[%s3 + $0xc] sm:$0xf]
  %v229 = vld [vmem:[%s3 + $0x10] sm:$0xf]
  %v230 = vld [vmem:[%s3 + $0x14] sm:$0xf]
  %v231 = vld [vmem:[%s3 + $0x18] sm:$0xf]
  %v232 = vld [vmem:[%s3 + $0x1c] sm:$0xf]
  %v233 = vld [vmem:[%s3 + $0x20] sm:$0xf]
  %v234 = vld [vmem:[%s3 + $0x24] sm:$0xf]
  %v235 = vld [vmem:[%s3 + $0x28] sm:$0xf]
  %v236 = vld [vmem:[%s3 + $0x2c] sm:$0xf]
  %v237 = vld [vmem:[%s3 + $0x30] sm:$0xf]
  %v238 = vld [vmem:[%s3 + $0x34] sm:$0xf]
  %v239 = vld [vmem:[%s3 + $0x38] sm:$0xf]
  %v240 = vld [vmem:[%s3 + $0x3c] sm:$0xf]
  %v241 = vld [vmem:[%s4] sm:$0x1]
  %v243 = vperm.slane %v241, 0
  %v261 = vunpack.c.l.b16 %v225
  %v262 = vunpack.c.l.b16 %v226
  %v263 = vunpack.c.l.b16 %v227
  %v264 = vunpack.c.l.b16 %v228
  %v265 = vunpack.c.l.b16 %v229
  %v266 = vunpack.c.l.b16 %v230
  %v267 = vunpack.c.l.b16 %v231
  %v268 = vunpack.c.l.b16 %v232
  %v269 = vunpack.c.l.b16 %v233
  %v270 = vunpack.c.l.b16 %v234
  %v271 = vunpack.c.l.b16 %v235
  %v272 = vunpack.c.l.b16 %v236
  %v273 = vunpack.c.l.b16 %v237
  %v274 = vunpack.c.l.b16 %v238
  %v275 = vunpack.c.l.b16 %v239
  %v276 = vunpack.c.l.b16 %v240
  %v277 = vpack.c.b16 %v262, %v261
  %v278 = vpack.c.b16 %v264, %v263
  %v279 = vpack.c.b16 %v266, %v265
  %v280 = vpack.c.b16 %v268, %v267
  %v281 = vpack.c.b16 %v270, %v269
  %v282 = vpack.c.b16 %v272, %v271
  %v283 = vpack.c.b16 %v274, %v273
  %v284 = vpack.c.b16 %v276, %v275
  %293 = vmatpush.bf16.msra.mxu0 %v284
  %294 = vmatpush.bf16.msra.mxu0 %v283
  %295 = vmatpush.bf16.msra.mxu0 %v282
  %296 = vmatpush.bf16.msra.mxu0 %v281
  %297 = vmatpush.bf16.msra.mxu0 %v280
  %298 = vmatpush.bf16.msra.mxu0 %v279
  %299 = vmatpush.bf16.msra.mxu0 %v278
  %300 = vmatpush.bf16.msra.mxu0 %v277
  %301 = vmatmul.bf16.gmra.mxu0 %v217
  %v302 = vpop.f32.mrf.mxu0
  %v303 = vadd.f32 %v243, %v302
  %v304 = vpop.f32.mrf.mxu0
  %v305 = vadd.f32 %v243, %v304
  %306 = vmatmul.bf16.gmra.mxu0 %v218
  %v307 = vpop.f32.mrf.mxu0
  %v308 = vadd.f32 %v243, %v307
  %v309 = vpop.f32.mrf.mxu0
  %v310 = vadd.f32 %v243, %v309
  %311 = vmatmul.bf16.gmra.mxu0 %v219
  %v312 = vpop.f32.mrf.mxu0
  %v313 = vadd.f32 %v243, %v312
  %v314 = vpop.f32.mrf.mxu0
  %v315 = vadd.f32 %v243, %v314
  %316 = vmatmul.bf16.gmra.mxu0 %v220
  %v317 = vpop.f32.mrf.mxu0
  %v318 = vadd.f32 %v243, %v317
  %v319 = vpop.f32.mrf.mxu0
  %v320 = vadd.f32 %v243, %v319
  %321 = vmatmul.bf16.gmra.mxu0 %v221
  %v322 = vpop.f32.mrf.mxu0
  %v323 = vadd.f32 %v243, %v322
  %v324 = vpop.f32.mrf.mxu0
  %v325 = vadd.f32 %v243, %v324
  %326 = vmatmul.bf16.gmra.mxu0 %v222
  %v327 = vpop.f32.mrf.mxu0
  %v328 = vadd.f32 %v243, %v327
  %v329 = vpop.f32.mrf.mxu0
  %v330 = vadd.f32 %v243, %v329
  %331 = vmatmul.bf16.gmra.mxu0 %v223
  %v332 = vpop.f32.mrf.mxu0
  %v333 = vadd.f32 %v243, %v332
  %v334 = vpop.f32.mrf.mxu0
  %v335 = vadd.f32 %v243, %v334
  %336 = vmatmul.bf16.gmra.mxu0 %v224
  %v337 = vpop.f32.mrf.mxu0
  %v338 = vadd.f32 %v243, %v337
  %v339 = vpop.f32.mrf.mxu0
  %v340 = vadd.f32 %v243, %v339
  %341 = vdwg.mxu0
  %342 = vst [vmem:[%s5] sm:$0xff] %v303
  %343 = vst [vmem:[%s5 + $0x8] sm:$0xff] %v305
  %344 = vst [vmem:[%s5 + $0x10] sm:$0xff] %v308
  %345 = vst [vmem:[%s5 + $0x18] sm:$0xff] %v310
  %346 = vst [vmem:[%s5 + $0x20] sm:$0xff] %v313
  %347 = vst [vmem:[%s5 + $0x28] sm:$0xff] %v315
  %348 = vst [vmem:[%s5 + $0x30] sm:$0xff] %v318
  %349 = vst [vmem:[%s5 + $0x38] sm:$0xff] %v320
  %350 = vst [vmem:[%s5 + $0x40] sm:$0xff] %v323
  %351 = vst [vmem:[%s5 + $0x48] sm:$0xff] %v325
  %352 = vst [vmem:[%s5 + $0x50] sm:$0xff] %v328
  %353 = vst [vmem:[%s5 + $0x58] sm:$0xff] %v330
  %354 = vst [vmem:[%s5 + $0x60] sm:$0xff] %v333
  %355 = vst [vmem:[%s5 + $0x68] sm:$0xff] %v335
  %356 = vst [vmem:[%s5 + $0x70] sm:$0xff] %v338
  %357 = vst [vmem:[%s5 + $0x78] sm:$0xff] %v340
  // Predicated region
  $region22: #{simplenet_forward.1} parent=0 // pred_check
    _
  $region23: #{simplenet_forward.1} parent=0 // pred_check_branch
    %359 = sbr.rel (0) target = $region25
  $region24: #{simplenet_forward.1} parent=0 // pred_region
    _
  $region25: #{simplenet_forward.1} parent=0 // pred_fallthru
    _
  // Predicated region
  $region26: #{simplenet_forward.1} parent=0 // pred_check
    _
  $region27: #{simplenet_forward.1} parent=0 // pred_check_branch
    %361 = sbr.rel (0) target = $region29
  $region28: #{simplenet_forward.1} parent=0 // pred_region
    _
  $region29: #{simplenet_forward.1} parent=0 // pred_fallthru
    _

</llo_original>
